<compile_context>
chip_gen: v7x
topology: tpu7x:2x2x1
jax: 0.10.0
libtpu: 0.0.40
codegen_flags: <defaults>
</compile_context>

<pallas_src>
import jax
import jax.numpy as jnp
from jax.experimental import pallas as pl
from jax.experimental.pallas import tpu as pltpu

COST_FEAT = 0.98          # matcher config (relative weight of feature similarity)
COS_EPS = 1e-8            # clamp on ||x||*||y|| in the reference
COS_SQRT_EPS = 1e-4       # per-vector clamp; product clamp == COS_EPS


def _round_up(x, m):
    return ((x + m - 1) // m) * m


def _matcher_cost_kernel(x_ref, y_ref, pbox_ref, rbox_ref, pn2_ref, rn2_ref, out_ref):
    # Weighted cosine similarity on the MXU (y already carries -cost_feat and both
    # operands are pre-normalized): sim = -cf * cos(x, y).
    sim = jax.lax.dot_general(
        x_ref[...], y_ref[...],
        dimension_numbers=(((1,), (1,)), ((), ())),
        preferred_element_type=jnp.float32)                       # [tq, tr]

    # Euclidean cdist via the norm identity; cross term on the MXU (K = 4).
    # pbox already carries the -2 factor: cross = -2 * <p_s, r_s>.
    cross = jax.lax.dot_general(
        pbox_ref[...], rbox_ref[...],
        dimension_numbers=(((1,), (1,)), ((), ())),
        preferred_element_type=jnp.float32)                       # [tq, tr]

    d2 = jnp.maximum(pn2_ref[...] + rn2_ref[...] + cross, 0.0)    # ||p_s - r_s||^2 >= 0

    # C = cf*(1 - cos) + (1-cf)*dist  ==  cf + sim + sqrt(d2)   (weights pre-folded)
    out_ref[...] = COST_FEAT + sim + jnp.sqrt(d2)


def refer_track_matcher_cost(id_features, pred_boxes, ref_features, ref_boxes, input_size,
                             *, tq_max=512, tr_max=1024):
    """Computes C = cost_feat * cosine_dist + (1-cost_feat) * cdist, shaped [bs, nq, total_refs].

    id_features : [bs, nq, D]      pred_boxes : [bs, nq, 4]   (cx, cy, w, h normalized)
    ref_features: [Nr, D]          ref_boxes  : [Nr, 4]
    input_size  : [Nr, 2]          (as in the PyTorch module, Nr == bs * nq so that the
                                    broadcast `pred_boxes * scale` is well defined)
    """
    bs, nq, d = id_features.shape
    nr = ref_features.shape[0]
    nq_tot = bs * nq
    f32 = jnp.float32

    idf = id_features.reshape(nq_tot, d).astype(f32)
    reff = ref_features.astype(f32)

    # glue: scale boxes to pixels and divide w by h (aspect ratio), exactly as the module.
    pb = pred_boxes.reshape(nq_tot, 4).astype(f32)
    rb = ref_boxes.astype(f32)
    scale = jnp.concatenate([input_size, input_size], axis=1).astype(f32)      # [Nr, 4]
    rb = rb * scale
    pb = pb * scale
    rb = rb.at[:, 2].set(rb[:, 2] / rb[:, 3])
    pb = pb.at[:, 2].set(pb[:, 2] / pb[:, 3])

    # ---- Hoisted feature prep: normalize, fold -cost_feat, cast to bf16 ------------
    xn = jnp.sqrt(jnp.sum(idf * idf, axis=1, keepdims=True))                   # [Nq, 1]
    yn = jnp.sqrt(jnp.sum(reff * reff, axis=1, keepdims=True))                 # [Nr, 1]
    x_n = (idf / jnp.maximum(xn, COS_SQRT_EPS)).astype(jnp.bfloat16)           # [Nq, D]
    y_n = ((-COST_FEAT) * reff / jnp.maximum(yn, COS_SQRT_EPS)).astype(jnp.bfloat16)  # [Nr, D]

    # ---- Hoisted box prep: fold (1 - cost_feat), precompute squared norms ----------
    box_w = 1.0 - COST_FEAT
    pb_s = pb * box_w                                                          # [Nq, 4]
    rb_s = rb * box_w                                                          # [Nr, 4]
    pn2 = jnp.sum(pb_s * pb_s, axis=1, keepdims=True)                          # [Nq, 1]
    rn2 = jnp.sum(rb_s * rb_s, axis=1, keepdims=True).T                        # [1, Nr]
    pb_op = (-2.0) * pb_s                                                      # [Nq, 4]
    rb_op = rb_s                                                               # [Nr, 4]

    # Tile sizes: tq multiple of 16 (bf16 sublane packing), tr multiple of 128
    # (lane-dense stores). Pad the arrays and slice the result back.
    tq = min(tq_max, _round_up(nq_tot, 16))
    tr = min(tr_max, _round_up(nr, 128))
    # v7x megacore: keep >= 2 blocks along at least one "parallel" axis when possible.
    if _round_up(nq_tot, tq) // tq == 1 and _round_up(nr, tr) // tr == 1:
        if tr >= 256:
            tr = _round_up(tr // 2, 128)
        elif tq >= 32:
            tq = _round_up(tq // 2, 16)
    nq_pad = _round_up(nq_tot, tq)
    nr_pad = _round_up(nr, tr)

    def pad2(a, rows, cols):
        return jnp.pad(a, ((0, rows - a.shape[0]), (0, cols - a.shape[1])))

    x_p = pad2(x_n, nq_pad, d)
    y_p = pad2(y_n, nr_pad, d)
    pb_p = pad2(pb_op, nq_pad, 4)
    rb_p = pad2(rb_op, nr_pad, 4)
    pn2_p = pad2(pn2, nq_pad, 1)
    rn2_p = pad2(rn2, 1, nr_pad)

    grid = (nq_pad // tq, nr_pad // tr)

    # Double-buffered VMEM footprint (output f32 tile + bf16 feature blocks + small
    # box/norm operands). Give the compiler headroom without exceeding v7x's 64 MiB.
    fbytes = 2  # bf16
    footprint = 2 * (tq * tr * 4 + (tq + tr) * d * fbytes) + 2 * (tq + tr) * 5 * 4
    vmem_limit = int(min(64 * 1024 * 1024, max(32 * 1024 * 1024, 2 * footprint)))

    C_pad = pl.pallas_call(
        _matcher_cost_kernel,
        out_shape=jax.ShapeDtypeStruct((nq_pad, nr_pad), jnp.float32),
        grid=grid,
        in_specs=[
            pl.BlockSpec((tq, d), lambda i, j: (i, 0)),   # normalized query features (bf16)
            pl.BlockSpec((tr, d), lambda i, j: (j, 0)),   # normalized ref features * -cf (bf16)
            pl.BlockSpec((tq, 4), lambda i, j: (i, 0)),   # -2 * scaled pred boxes
            pl.BlockSpec((tr, 4), lambda i, j: (j, 0)),   # scaled ref boxes
            pl.BlockSpec((tq, 1), lambda i, j: (i, 0)),   # ||p_s||^2
            pl.BlockSpec((1, tr), lambda i, j: (0, j)),   # ||r_s||^2 (lane-dense)
        ],
        out_specs=pl.BlockSpec((tq, tr), lambda i, j: (i, j)),
        compiler_params=pltpu.CompilerParams(
            dimension_semantics=("parallel", "parallel"),
            vmem_limit_bytes=vmem_limit),
    )(x_p, y_p, pb_p, rb_p, pn2_p, rn2_p)

    return C_pad[:nq_tot, :nr].reshape(bs, nq, nr)


def _reference_cost(id_features, pred_boxes, ref_features, ref_boxes, input_size):
    """Pure-JAX reference mirroring the PyTorch forward (up to the LAP solver)."""
    bs, nq, d = id_features.shape
    x = id_features.reshape(bs * nq, d).astype(jnp.float32)
    y = ref_features.astype(jnp.float32)
    pb = pred_boxes.reshape(bs * nq, 4).astype(jnp.float32)
    rb = ref_boxes.astype(jnp.float32)
    scale = jnp.concatenate([input_size, input_size], axis=1).astype(jnp.float32)
    rb = rb * scale
    pb = pb * scale
    rb = rb.at[:, 2].set(rb[:, 2] / rb[:, 3])
    pb = pb.at[:, 2].set(pb[:, 2] / pb[:, 3])
    w1 = jnp.linalg.norm(x, axis=1, keepdims=True)
    w2 = jnp.linalg.norm(y, axis=1, keepdims=True)
    cost_feature = 1.0 - (x @ y.T) / jnp.maximum(w1 * w2.T, COS_EPS)
    diff = pb[:, None, :] - rb[None, :, :]
    cost_distance = jnp.sqrt(jnp.sum(diff * diff, axis=-1))
    C = COST_FEAT * cost_feature + (1.0 - COST_FEAT) * cost_distance
    return C.reshape(bs, nq, -1)


if __name__ == "__main__":
    key = jax.random.PRNGKey(0)
    bs, nq, emb = 2, 8, 32
    n_ref_per_img = nq                  # so total_refs == bs * nq (matches the module's broadcast)
    nr = bs * n_ref_per_img

    k1, k2, k3, k4 = jax.random.split(key, 4)
    id_features = jax.random.normal(k1, (bs, nq, emb), dtype=jnp.float32)
    ref_features = jax.random.normal(k2, (nr, emb), dtype=jnp.float32)
    # boxes in normalized cxcywh with strictly positive w, h
    pred_boxes = jax.random.uniform(k3, (bs, nq, 4), minval=0.1, maxval=0.9, dtype=jnp.float32)
    ref_boxes = jax.random.uniform(k4, (nr, 4), minval=0.1, maxval=0.9, dtype=jnp.float32)
    input_size = jnp.tile(jnp.array([[640.0, 480.0]], dtype=jnp.float32), (nr, 1))

    C = refer_track_matcher_cost(id_features, pred_boxes, ref_features, ref_boxes, input_size)
    C = jax.block_until_ready(C)

    C_ref = _reference_cost(id_features, pred_boxes, ref_features, ref_boxes, input_size)
    assert C.shape == (bs, nq, nr)
    # bf16 features (f32 accumulation) perturb the cosine term at the ~1e-3 level.
    assert jnp.allclose(C, C_ref, rtol=2e-2, atol=2e-2), "mismatch vs pure-JAX reference"

    print("KERNEL_OK")
</pallas_src>

<mosaic_0001>
module attributes {stable_mosaic.version = 11 : i64} {
  func.func @_matcher_cost_kernel(%arg0: i32, %arg1: i32, %arg2: memref<16x32xbf16, #tpu.memory_space<vmem>>, %arg3: memref<128x32xbf16, #tpu.memory_space<vmem>>, %arg4: memref<16x4xf32, #tpu.memory_space<vmem>>, %arg5: memref<128x4xf32, #tpu.memory_space<vmem>>, %arg6: memref<16x1xf32, #tpu.memory_space<vmem>>, %arg7: memref<1x128xf32, #tpu.memory_space<vmem>>, %arg8: memref<16x128xf32, #tpu.memory_space<vmem>>) attributes {dimension_semantics = [#tpu.dimension_semantics<parallel>, #tpu.dimension_semantics<parallel>], iteration_bounds = array<i64: 1, 1>, scalar_prefetch = 0 : i64, scratch_operands = 0 : i64, tpu.core_type = #tpu.core_type<tc>, window_params = [{transform_indices = @transform_0, window_bounds = array<i64: 16, 32>}, {transform_indices = @transform_1, window_bounds = array<i64: 128, 32>}, {transform_indices = @transform_2, window_bounds = array<i64: 16, 4>}, {transform_indices = @transform_3, window_bounds = array<i64: 128, 4>}, {transform_indices = @transform_4, window_bounds = array<i64: 16, 1>}, {transform_indices = @transform_5, window_bounds = array<i64: 1, 128>}, {transform_indices = @transform_6, window_bounds = array<i64: 16, 128>}]} {
    %c0 = arith.constant 0 : index
    %c0_0 = arith.constant 0 : index
    %0 = vector.load %arg2[%c0, %c0_0] : memref<16x32xbf16, #tpu.memory_space<vmem>>, vector<16x32xbf16>
    %c0_1 = arith.constant 0 : index
    %c0_2 = arith.constant 0 : index
    %1 = vector.load %arg3[%c0_1, %c0_2] : memref<128x32xbf16, #tpu.memory_space<vmem>>, vector<128x32xbf16>
    %cst = arith.constant dense<0.000000e+00> : vector<16x128xf32>
    %2 = tpu.matmul %0, %1, %cst {dimension_numbers = #tpu.dot_dimension_numbers<[1], [1], [0], [0], [0, 0, 1, 0], [], []>} : vector<16x32xbf16>, vector<128x32xbf16>, vector<16x128xf32> -> vector<16x128xf32>
    %c0_3 = arith.constant 0 : index
    %c0_4 = arith.constant 0 : index
    %3 = vector.load %arg4[%c0_3, %c0_4] : memref<16x4xf32, #tpu.memory_space<vmem>>, vector<16x4xf32>
    %c0_5 = arith.constant 0 : index
    %c0_6 = arith.constant 0 : index
    %4 = vector.load %arg5[%c0_5, %c0_6] : memref<128x4xf32, #tpu.memory_space<vmem>>, vector<128x4xf32>
    %cst_7 = arith.constant dense<0.000000e+00> : vector<16x128xf32>
    %5 = tpu.matmul %3, %4, %cst_7 {dimension_numbers = #tpu.dot_dimension_numbers<[1], [1], [0], [0], [0, 0, 1, 0], [], []>} : vector<16x4xf32>, vector<128x4xf32>, vector<16x128xf32> -> vector<16x128xf32>
    %c0_8 = arith.constant 0 : index
    %c0_9 = arith.constant 0 : index
    %6 = vector.load %arg6[%c0_8, %c0_9] : memref<16x1xf32, #tpu.memory_space<vmem>>, vector<16x1xf32>
    %c0_10 = arith.constant 0 : index
    %c0_11 = arith.constant 0 : index
    %7 = vector.load %arg7[%c0_10, %c0_11] : memref<1x128xf32, #tpu.memory_space<vmem>>, vector<1x128xf32>
    %8 = vector.broadcast %6 : vector<16x1xf32> to vector<16x128xf32>
    %9 = vector.broadcast %7 : vector<1x128xf32> to vector<16x128xf32>
    %10 = arith.addf %8, %9 : vector<16x128xf32>
    %11 = arith.addf %10, %5 : vector<16x128xf32>
    %cst_12 = arith.constant 0.000000e+00 : f32
    %12 = vector.broadcast %cst_12 : f32 to vector<16x128xf32>
    %13 = arith.maximumf %11, %12 : vector<16x128xf32>
    %cst_13 = arith.constant 9.800000e-01 : f32
    %14 = vector.broadcast %cst_13 : f32 to vector<16x128xf32>
    %15 = arith.addf %14, %2 : vector<16x128xf32>
    %16 = math.sqrt %13 : vector<16x128xf32>
    %17 = arith.addf %15, %16 : vector<16x128xf32>
    %c0_14 = arith.constant 0 : index
    %c0_15 = arith.constant 0 : index
    %18 = vector.load %arg8[%c0_14, %c0_15] : memref<16x128xf32, #tpu.memory_space<vmem>>, vector<16x128xf32>
    tpu.vector_store %arg8[%c0_14, %c0_15], %17 {strides = array<i32>} : memref<16x128xf32, #tpu.memory_space<vmem>>, vector<16x128xf32>,
    return
  }
  func.func @transform_0(%arg0: i32, %arg1: i32) -> (i32, i32) {
    %c0_i32 = arith.constant 0 : i32
    %c0_i32_0 = arith.constant 0 : i32
    return %arg0, %c0_i32 : i32, i32
  }
  func.func @transform_1(%arg0: i32, %arg1: i32) -> (i32, i32) {
    %c0_i32 = arith.constant 0 : i32
    %c0_i32_0 = arith.constant 0 : i32
    return %arg1, %c0_i32 : i32, i32
  }
  func.func @transform_2(%arg0: i32, %arg1: i32) -> (i32, i32) {
    %c0_i32 = arith.constant 0 : i32
    %c0_i32_0 = arith.constant 0 : i32
    return %arg0, %c0_i32 : i32, i32
  }
  func.func @transform_3(%arg0: i32, %arg1: i32) -> (i32, i32) {
    %c0_i32 = arith.constant 0 : i32
    %c0_i32_0 = arith.constant 0 : i32
    return %arg1, %c0_i32 : i32, i32
  }
  func.func @transform_4(%arg0: i32, %arg1: i32) -> (i32, i32) {
    %c0_i32 = arith.constant 0 : i32
    %c0_i32_0 = arith.constant 0 : i32
    return %arg0, %c0_i32 : i32, i32
  }
  func.func @transform_5(%arg0: i32, %arg1: i32) -> (i32, i32) {
    %c0_i32 = arith.constant 0 : i32
    %c0_i32_0 = arith.constant 0 : i32
    return %c0_i32, %arg1 : i32, i32
  }
  func.func @transform_6(%arg0: i32, %arg1: i32) -> (i32, i32) {
    %c0_i32 = arith.constant 0 : i32
    return %arg0, %arg1 : i32, i32
  }
}

</mosaic_0001>

<llo_original>
// kernel: tpu_custom_call.1
$region0: #{tpu_custom_call.1}
  #allocation0 [shape = 'u32[]', space=smem, size = 0x4, offset = 0x4, fixed_abs, tag = 'smem constant byte address 0x4 - core index']
  #allocation1 [shape = 'u32[144,128]{1,0:T(1,128)}', space=vmem, size = 0x12000, scoped, tag = 'internal scratch']
  %s0 = inlined_call_operand.vmem [shape: bf16[16,32], index: 0, kind: input, shape index: {}]
  %s1 = inlined_call_operand.vmem [shape: bf16[128,32], index: 1, kind: input, shape index: {}]
  %s2 = inlined_call_operand.vmem [shape: f32[16,4], index: 2, kind: input, shape index: {}]
  %s3 = inlined_call_operand.vmem [shape: f32[128,4], index: 3, kind: input, shape index: {}]
  %s4 = inlined_call_operand.vmem [shape: f32[16,1], index: 4, kind: input, shape index: {}]
  %s5 = inlined_call_operand.vmem [shape: f32[1,128], index: 5, kind: input, shape index: {}]
  %s6 = inlined_call_operand.hbm [shape: f32[16,128], index: 6, kind: output, shape index: {}]
  %s7 = sld [smem:[#allocation0]]
  $region34: #{tpu_custom_call.1} parent=0
    _
  %s9 = ssub.s32 1, %s7
  %s10 = scalar_select 0, %s9, %s7
  $region1: #{tpu_custom_call.1} parent=0
    #allocation2 [shape = 'u8[8192]{0}', space=vmem, size = 0x2000, scoped, tag = 'output window, operand 0, single buffered']
    #allocation3 [shape = 's32[1]{0}', space=sflag, size = 0x4, scoped, tag = 'scoped memory for tpu_custom_call.1']
    %11 = vsyncpa [#allocation3], 0
    // Predicated region
    $region2: #{tpu_custom_call.1} parent=1 // pred_check
      _
    $region3: #{tpu_custom_call.1} parent=1 // pred_check_branch
      %13 = sbr.rel (0) target = $region5
    $region4: #{tpu_custom_call.1} parent=1 // pred_region
      _
    $region5: #{tpu_custom_call.1} parent=1 // pred_fallthru
      _
    // Predicated region
    $region6: #{tpu_custom_call.1} parent=1 // pred_check
      _
    $region7: #{tpu_custom_call.1} parent=1 // pred_check_branch
      %15 = sbr.rel (0) target = $region9
    $region8: #{tpu_custom_call.1} parent=1 // pred_region
      _
    $region9: #{tpu_custom_call.1} parent=1 // pred_fallthru
      _
    // Predicated region
    $region10: #{tpu_custom_call.1} parent=1 // pred_check
      _
    $region11: #{tpu_custom_call.1} parent=1 // pred_check_branch
      %17 = sbr.rel (0) target = $region13
    $region12: #{tpu_custom_call.1} parent=1 // pred_region
      _
    $region13: #{tpu_custom_call.1} parent=1 // pred_fallthru
      _
    // Predicated region
    $region14: #{tpu_custom_call.1} parent=1 // pred_check
      _
    $region15: #{tpu_custom_call.1} parent=1 // pred_check_branch
      %19 = sbr.rel (0) target = $region17
    $region16: #{tpu_custom_call.1} parent=1 // pred_region
      _
    $region17: #{tpu_custom_call.1} parent=1 // pred_fallthru
      _
    // Predicated region
    $region18: #{tpu_custom_call.1} parent=1 // pred_check
      _
    $region19: #{tpu_custom_call.1} parent=1 // pred_check_branch
      %21 = sbr.rel (0) target = $region21
    $region20: #{tpu_custom_call.1} parent=1 // pred_region
      _
    $region21: #{tpu_custom_call.1} parent=1 // pred_fallthru
      _
    // Predicated region
    $region22: #{tpu_custom_call.1} parent=1 // pred_check
      _
    $region23: #{tpu_custom_call.1} parent=1 // pred_check_branch
      %23 = sbr.rel (0) target = $region25
    $region24: #{tpu_custom_call.1} parent=1 // pred_region
      _
    $region25: #{tpu_custom_call.1} parent=1 // pred_fallthru
      _
    %v25 = vld [vmem:[%s0] sm:$0xf]
    %v26 = vld [vmem:[%s0 + $0x4] sm:$0xf]
    %v27 = vld [vmem:[%s1] sm:$0xf]
    %v28 = vld [vmem:[%s1 + $0x4] sm:$0xf]
    %v29 = vld [vmem:[%s1 + $0x8] sm:$0xf]
    %v30 = vld [vmem:[%s1 + $0xc] sm:$0xf]
    %v31 = vld [vmem:[%s1 + $0x10] sm:$0xf]
    %v32 = vld [vmem:[%s1 + $0x14] sm:$0xf]
    %v33 = vld [vmem:[%s1 + $0x18] sm:$0xf]
    %v34 = vld [vmem:[%s1 + $0x1c] sm:$0xf]
    %v35 = vld [vmem:[%s1 + $0x20] sm:$0xf]
    %v36 = vld [vmem:[%s1 + $0x24] sm:$0xf]
    %v37 = vld [vmem:[%s1 + $0x28] sm:$0xf]
    %v38 = vld [vmem:[%s1 + $0x2c] sm:$0xf]
    %v39 = vld [vmem:[%s1 + $0x30] sm:$0xf]
    %v40 = vld [vmem:[%s1 + $0x34] sm:$0xf]
    %v41 = vld [vmem:[%s1 + $0x38] sm:$0xf]
    %v42 = vld [vmem:[%s1 + $0x3c] sm:$0xf]
    %v43 = vld [vmem:[%s2] sm:$0xff]
    %v44 = vld [vmem:[%s2 + $0x8] sm:$0xff]
    %v45 = vld [vmem:[%s3] sm:$0xff]
    %v46 = vld [vmem:[%s3 + $0x8] sm:$0xff]
    %v47 = vld [vmem:[%s3 + $0x10] sm:$0xff]
    %v48 = vld [vmem:[%s3 + $0x18] sm:$0xff]
    %v49 = vld [vmem:[%s3 + $0x20] sm:$0xff]
    %v50 = vld [vmem:[%s3 + $0x28] sm:$0xff]
    %v51 = vld [vmem:[%s3 + $0x30] sm:$0xff]
    %v52 = vld [vmem:[%s3 + $0x38] sm:$0xff]
    %v53 = vld [vmem:[%s3 + $0x40] sm:$0xff]
    %v54 = vld [vmem:[%s3 + $0x48] sm:$0xff]
    %v55 = vld [vmem:[%s3 + $0x50] sm:$0xff]
    %v56 = vld [vmem:[%s3 + $0x58] sm:$0xff]
    %v57 = vld [vmem:[%s3 + $0x60] sm:$0xff]
    %v58 = vld [vmem:[%s3 + $0x68] sm:$0xff]
    %v59 = vld [vmem:[%s3 + $0x70] sm:$0xff]
    %v60 = vld [vmem:[%s3 + $0x78] sm:$0xff]
    %vm61 = vcmask 31744
    %v63 = vsel %vm61, %v43, 0
    %v66 = vsel %vm61, %v44, 0
    %v69 = vsel %vm61, %v45, 0
    %v72 = vsel %vm61, %v46, 0
    %v75 = vsel %vm61, %v47, 0
    %v78 = vsel %vm61, %v48, 0
    %v81 = vsel %vm61, %v49, 0
    %v84 = vsel %vm61, %v50, 0
    %v87 = vsel %vm61, %v51, 0
    %v90 = vsel %vm61, %v52, 0
    %v93 = vsel %vm61, %v53, 0
    %v96 = vsel %vm61, %v54, 0
    %v99 = vsel %vm61, %v55, 0
    %v102 = vsel %vm61, %v56, 0
    %v105 = vsel %vm61, %v57, 0
    %v108 = vsel %vm61, %v58, 0
    %v111 = vsel %vm61, %v59, 0
    %v114 = vsel %vm61, %v60, 0
    %116 = vmatprep.subr.mxu0 0.0
    %117 = vmatpush1.xpose.msra.mxu0 %v69
    %118 = vmatprep.subr.mxu0 0.0
    %119 = vmatpush1.xpose.msra.mxu0 %v72
    %120 = vmatprep.subr.mxu0 0.0
    %121 = vmatpush1.xpose.msra.mxu0 %v75
    %122 = vmatprep.subr.mxu0 0.0
    %123 = vmatpush1.xpose.msra.mxu0 %v78
    %124 = vmatprep.subr.mxu0 0.0
    %125 = vmatpush1.xpose.msra.mxu0 %v81
    %126 = vmatprep.subr.mxu0 0.0
    %127 = vmatpush1.xpose.msra.mxu0 %v84
    %128 = vmatprep.subr.mxu0 0.0
    %129 = vmatpush1.xpose.msra.mxu0 %v87
    %130 = vmatprep.subr.mxu0 0.0
    %131 = vmatpush1.xpose.msra.mxu0 %v90
    %132 = vmatprep.subr.mxu0 0.0
    %133 = vmatpush1.xpose.msra.mxu0 %v93
    %134 = vmatprep.subr.mxu0 0.0
    %135 = vmatpush1.xpose.msra.mxu0 %v96
    %136 = vmatprep.subr.mxu0 0.0
    %137 = vmatpush1.xpose.msra.mxu0 %v99
    %138 = vmatprep.subr.mxu0 0.0
    %139 = vmatpush1.xpose.msra.mxu0 %v102
    %140 = vmatprep.subr.mxu0 0.0
    %141 = vmatpush1.xpose.msra.mxu0 %v105
    %142 = vmatprep.subr.mxu0 0.0
    %143 = vmatpush1.xpose.msra.mxu0 %v108
    %144 = vmatprep.subr.mxu0 0.0
    %145 = vmatpush1.xpose.msra.mxu0 %v111
    %146 = vmatprep.subr.mxu0 0.0
    %147 = vmatpush1.xpose.msra.mxu0 %v114
    %148 = vmatprep.subr.mxu0 0.0
    %149 = vmatpush1.xpose.msra.mxu0 0.0
    %150 = vmatprep.subr.mxu0 0.0
    %151 = vmatpush1.xpose.msra.mxu0 0.0
    %152 = vmatprep.subr.mxu0 0.0
    %153 = vmatpush1.xpose.msra.mxu0 0.0
    %154 = vmatprep.subr.mxu0 0.0
    %155 = vmatpush1.xpose.msra.mxu0 0.0
    %156 = vmatprep.subr.mxu0 0.0
    %157 = vmatpush1.xpose.msra.mxu0 0.0
    %158 = vmatprep.subr.mxu0 0.0
    %159 = vmatpush1.xpose.msra.mxu0 0.0
    %160 = vmatprep.subr.mxu0 0.0
    %161 = vmatpush1.xpose.msra.mxu0 0.0
    %162 = vmatprep.subr.mxu0 0.0
    %163 = vmatpush1.xpose.msra.mxu0 0.0
    %164 = vmatprep.subr.mxu0 0.0
    %165 = vmatpush1.xpose.msra.mxu0 0.0
    %166 = vmatprep.subr.mxu0 0.0
    %167 = vmatpush1.xpose.msra.mxu0 0.0
    %168 = vmatprep.subr.mxu0 0.0
    %169 = vmatpush1.xpose.msra.mxu0 0.0
    %170 = vmatprep.subr.mxu0 0.0
    %171 = vmatpush1.xpose.msra.mxu0 0.0
    %172 = vmatprep.subr.mxu0 0.0
    %173 = vmatpush1.xpose.msra.mxu0 0.0
    %174 = vmatprep.subr.mxu0 0.0
    %175 = vmatpush1.xpose.msra.mxu0 0.0
    %176 = vmatprep.subr.mxu0 0.0
    %177 = vmatpush1.xpose.msra.mxu0 0.0
    %178 = vmatprep.subr.mxu0 0.0
    %179 = vmatpush1.xpose.msra.mxu0 0.0
    %180 = vmatprep.mubr.f32.mxu0 0.0
    %181 = vmatmul.mubr.f32.gmra.mrb[0].mxu0 %v63
    %v182 = vpop.f32.mrb[0].mxu0
    %v183 = vadd.f32 0.0, %v182
    %v184 = vpop.f32.mrb[0].mxu0
    %185 = vmatprep.mubr.f32.mxu0 0.0
    %186 = vmatmul.mubr.f32.gmra.mrb[0].mxu0 %v66
    %v187 = vpop.f32.mrb[0].mxu0
    %v188 = vadd.f32 0.0, %v187
    %v189 = vpop.f32.mrb[0].mxu0
    %190 = vdwg.mxu0
    %v191 = vld [vmem:[%s4] sm:$0xff]
    %v192 = vld [vmem:[%s4 + $0x8] sm:$0xff]
    %v193 = vld [vmem:[%s5] sm:$0x1]
    %195 = vset.pattern.permute.xlu0 0
    %196 = vperm.xlu0 %195, %v191
    %v197 = vpop.permute.xlu0 %196
    %200 = vset.pattern.permute.xlu0 0
    %201 = vperm.xlu0 %200, %v192
    %v202 = vpop.permute.xlu0 %201
    %v205 = vlaneseq
    %v206 = vshrl.u32 %v205, 7
    %v207 = vsub.s32 0, %v206
    %v208 = vrot.slane %v193, %v207
    %v210 = vadd.f32 %v197, %v208
    %v211 = vadd.f32 %v202, %v208
    %v212 = vadd.f32 %v210, %v183
    %v213 = vadd.f32 %v211, %v188
    %v214 = vmax.f32 %v212, 0.0
    %v215 = vmax.f32 %v213, 0.0
    %v218 = vunpack.c.l.b16 %v25
    %v219 = vunpack.c.l.b16 %v26
    %v220 = vpack.c.b16 %v219, %v218
    %v237 = vunpack.c.l.b16 %v27
    %v238 = vunpack.c.l.b16 %v28
    %v239 = vunpack.c.l.b16 %v29
    %v240 = vunpack.c.l.b16 %v30
    %v241 = vunpack.c.l.b16 %v31
    %v242 = vunpack.c.l.b16 %v32
    %v243 = vunpack.c.l.b16 %v33
    %v244 = vunpack.c.l.b16 %v34
    %v245 = vunpack.c.l.b16 %v35
    %v246 = vunpack.c.l.b16 %v36
    %v247 = vunpack.c.l.b16 %v37
    %v248 = vunpack.c.l.b16 %v38
    %v249 = vunpack.c.l.b16 %v39
    %v250 = vunpack.c.l.b16 %v40
    %v251 = vunpack.c.l.b16 %v41
    %v252 = vunpack.c.l.b16 %v42
    %v253 = vpack.c.b16 %v238, %v237
    %v254 = vpack.c.b16 %v240, %v239
    %v255 = vpack.c.b16 %v242, %v241
    %v256 = vpack.c.b16 %v244, %v243
    %v257 = vpack.c.b16 %v246, %v245
    %v258 = vpack.c.b16 %v248, %v247
    %v259 = vpack.c.b16 %v250, %v249
    %v260 = vpack.c.b16 %v252, %v251
    %vm261 = vcmask 261120
    %v263 = vsel %vm261, %v220, 0
    %v266 = vsel %vm261, %v253, 0
    %v269 = vsel %vm261, %v254, 0
    %v272 = vsel %vm261, %v255, 0
    %v275 = vsel %vm261, %v256, 0
    %v278 = vsel %vm261, %v257, 0
    %v281 = vsel %vm261, %v258, 0
    %v284 = vsel %vm261, %v259, 0
    %v287 = vsel %vm261, %v260, 0
    %289 = vmatprep.subr.bf16.mxu0 0
    %290 = vmatpush1.bf16.xpose.msra.mxu0 %v266
    %291 = vmatprep.subr.bf16.mxu0 0
    %292 = vmatpush1.bf16.xpose.msra.mxu0 %v269
    %293 = vmatprep.subr.bf16.mxu0 0
    %294 = vmatpush1.bf16.xpose.msra.mxu0 %v272
    %295 = vmatprep.subr.bf16.mxu0 0
    %296 = vmatpush1.bf16.xpose.msra.mxu0 %v275
    %297 = vmatprep.subr.bf16.mxu0 0
    %298 = vmatpush1.bf16.xpose.msra.mxu0 %v278
    %299 = vmatprep.subr.bf16.mxu0 0
    %300 = vmatpush1.bf16.xpose.msra.mxu0 %v281
    %301 = vmatprep.subr.bf16.mxu0 0
    %302 = vmatpush1.bf16.xpose.msra.mxu0 %v284
    %303 = vmatprep.subr.bf16.mxu0 0
    %304 = vmatpush1.bf16.xpose.msra.mxu0 %v287
    %305 = vmatprep.subr.bf16.mxu0 0
    %306 = vmatpush1.bf16.xpose.msra.mxu0 0
    %307 = vmatprep.subr.bf16.mxu0 0
    %308 = vmatpush1.bf16.xpose.msra.mxu0 0
    %309 = vmatprep.subr.bf16.mxu0 0
    %310 = vmatpush1.bf16.xpose.msra.mxu0 0
    %311 = vmatprep.subr.bf16.mxu0 0
    %312 = vmatpush1.bf16.xpose.msra.mxu0 0
    %313 = vmatprep.subr.bf16.mxu0 0
    %314 = vmatpush1.bf16.xpose.msra.mxu0 0
    %315 = vmatprep.subr.bf16.mxu0 0
    %316 = vmatpush1.bf16.xpose.msra.mxu0 0
    %317 = vmatprep.subr.bf16.mxu0 0
    %318 = vmatpush1.bf16.xpose.msra.mxu0 0
    %319 = vmatprep.subr.bf16.mxu0 0
    %320 = vmatpush1.bf16.xpose.msra.mxu0 0
    %321 = vmatprep.mubr.bf16.mxu0 0
    %322 = vmatmul.mubr.bf16.gmra.mrb[0].mxu0 %v263
    %v323 = vpop.f32.mrb[0].mxu0
    %v324 = vadd.f32 0.98, %v323
    %v325 = vpop.f32.mrb[0].mxu0
    %v326 = vpop.f32.mrb[0].mxu0
    %v327 = vadd.f32 0.98, %v326
    %v328 = vpop.f32.mrb[0].mxu0
    %329 = vdwg.mxu0
    %v330 = vrsqrt.pop %v214
    %v331 = vmul.f32 %v214, %v330
    %vm332 = vcmp.eq.f32.partialorder %v214, inf
    %v333 = vsel %vm332, %v214, %v331
    %vm334 = vcmp.eq.f32.partialorder %v214, 0.0
    %v335 = vand.u32 %v214, 2147483648
    %v336 = vsel %vm334, %v335, %v333
    %v337 = vrsqrt.pop %v215
    %v338 = vmul.f32 %v215, %v337
    %vm339 = vcmp.eq.f32.partialorder %v215, inf
    %v340 = vsel %vm339, %v215, %v338
    %vm341 = vcmp.eq.f32.partialorder %v215, 0.0
    %v342 = vand.u32 %v215, 2147483648
    %v343 = vsel %vm341, %v342, %v340
    %v344 = vadd.f32 %v324, %v336
    %v345 = vadd.f32 %v327, %v343
    %346 = vst [vmem:[#allocation2] sm:$0xff] %v344
    %347 = vst [vmem:[#allocation2 + $0x8] sm:$0xff] %v345
    // Predicated region
    $region26: #{tpu_custom_call.1} parent=1 // pred_check
      _
    $region27: #{tpu_custom_call.1} parent=1 // pred_check_branch
      %349 = sbr.rel (0) target = $region29
    $region28: #{tpu_custom_call.1} parent=1 // pred_region
      %s351 = ssub.s32 256, 256
      %352 = vsyncadd [#allocation3], %s351
      %s353 = sshll.u32 [#allocation2], 4
      %s354 = int_to_ptr.vmem [resolvable:$true] %s353
      %359 = dma.vmem_to_hbm [thread:$0]  %s354, 256, %s6, [#allocation3], 128, 128, 8
    $region29: #{tpu_custom_call.1} parent=1 // pred_fallthru
      _
    // Predicated region
    $region30: #{tpu_custom_call.1} parent=1 // pred_check
      _
    $region31: #{tpu_custom_call.1} parent=1 // pred_check_branch
      %361 = sbr.rel (0) target = $region33
    $region32: #{tpu_custom_call.1} parent=1 // pred_region
      %362 = dma.done [#allocation3], 256
    $region33: #{tpu_custom_call.1} parent=1 // pred_fallthru
      _
    %363 = vsyncpa [#allocation3], 1

</llo_original>
